<compile_context>
chip_gen: v7x
topology: tpu7x:2x2x1
jax: 0.10.0
libtpu: 0.0.40
codegen_flags: <defaults>
</compile_context>

<pallas_src>
import functools

import jax
import jax.numpy as jnp
from jax import lax
from jax.experimental import pallas as pl
from jax.experimental.pallas import tpu as pltpu

_LANES = 128
_LANE_CHUNK = 512                       # lane chunk for the flat (N, M) layout
_TARGET_BLOCK_BYTES = 4 * 1024 * 1024   # per-input block footprint


def _round_up(x, m):
    return ((x + m - 1) // m) * m


def _round_down(x, m):
    return (x // m) * m


def _sublane_pack(dtype):
    """Rows of one native (pack, 128) tile for this dtype."""
    return {4: 8, 2: 16, 1: 32}.get(jnp.dtype(dtype).itemsize, 8)


def _dice_sums_kernel(pred_ref, label_ref, out_ref, a_acc, b_acc, c_acc, *,
                      blocks_per_split, span, total_valid, chunk, n_chunks,
                      can_be_partial):
    """Accumulate per-sample sum(p*l), sum(p*p), sum(l*l) partial sums.

    pred_ref / label_ref: (tn, tr, 128) row layout or (tn, tm) flat layout.
    out_ref: (1, tn, 3) partial sums for this (batch block, split).
    a/b/c_acc: f32 scratch; persist across the innermost ("arbitrary") grid
    axis j and are re-initialised at j == 0.  Correctness of this pattern
    relies on the reduction axis being the innermost grid axis.
    """
    s = pl.program_id(1)
    j = pl.program_id(2)
    rank = len(pred_ref.shape)

    @pl.when(j == 0)
    def _():
        a_acc[...] = jnp.zeros_like(a_acc)
        b_acc[...] = jnp.zeros_like(b_acc)
        c_acc[...] = jnp.zeros_like(c_acc)

    # Logical start of this block along the reduction axis (rows or lanes)
    # and the number of still-valid positions.  (The index_map clamps the
    # DMA block index; this logical position is what the masking uses.)
    base = (s * blocks_per_split + j) * span
    valid = total_valid - base

    def load(ref, c):
        start = c * chunk
        if not isinstance(start, int):
            start = pl.multiple_of(start, chunk)
        idx = [slice(None)] * rank
        idx[1] = pl.ds(start, chunk)
        return ref[tuple(idx)]

    def group8(x):
        # (tn, ch, 128) -> (tn, 8, 128) via plain vreg adds (VPU only);
        # identity for the flat layout / ch == 8.
        if rank == 2 or x.shape[1] == 8:
            return x
        out = x[:, 0:8, :]
        for k in range(8, x.shape[1], 8):
            out = out + x[:, k:k + 8, :]
        return out

    def chunk_sums(c, bound):
        p = jax.nn.sigmoid(load(pred_ref, c).astype(jnp.float32))
        l = load(label_ref, c).astype(jnp.float32)
        if bound is not None:
            # Zero out positions past the valid extent (select, so NaN/Inf
            # garbage in out-of-bounds tail data cannot leak through).
            pos = lax.broadcasted_iota(jnp.int32, p.shape, 1)
            keep = pos < bound
            p = jnp.where(keep, p, 0.0)
            l = jnp.where(keep, l, 0.0)
        return group8(p * l), group8(p * p), group8(l * l)

    def run(masked):
        def step(c, carry):
            a, b, cc = carry
            da, db, dc = chunk_sums(c, (valid - c * chunk) if masked else None)
            return a + da, b + db, cc + dc

        init = (jnp.zeros(a_acc.shape, jnp.float32),
                jnp.zeros(b_acc.shape, jnp.float32),
                jnp.zeros(c_acc.shape, jnp.float32))
        if n_chunks == 1:
            a, b, cc = step(0, init)
        else:
            a, b, cc = lax.fori_loop(0, n_chunks, step, init)
        a_acc[...] += a
        b_acc[...] += b
        c_acc[...] += cc

    if can_be_partial:
        @pl.when(valid >= span)                    # fully in-bounds block
        def _():
            run(False)

        @pl.when(jnp.logical_and(valid > 0, valid < span))   # ragged tail
        def _():
            run(True)
        # valid <= 0 (clamped duplicate block of an uneven split): no-op.
    else:
        run(False)

    @pl.when(j == pl.num_programs(2) - 1)
    def _():
        def colsum(acc):
            x = acc[...]
            while x.ndim > 2:
                x = jnp.sum(x, axis=1)
            return jnp.sum(x, axis=-1, keepdims=True)          # (tn, 1)

        out_ref[0] = jnp.concatenate(
            [colsum(a_acc), colsum(b_acc), colsum(c_acc)], axis=-1)


def _dice_partial_sums(pred, label):
    """Per-sample partial sums; returns (splits, N, 3) float32."""
    n = pred.shape[0]
    pred2 = pred.reshape(n, -1)          # free view (contiguous flatten)
    label2 = label.reshape(n, -1)
    if label2.dtype == jnp.bool_:
        # TODO(synk): bool labels take one cast pass; feed int8/bf16/f32 labels to avoid it.
        label2 = label2.astype(jnp.int8)
    m = pred2.shape[1]

    item_p = jnp.dtype(pred2.dtype).itemsize
    item_l = jnp.dtype(label2.dtype).itemsize
    max_item = max(item_p, item_l)

    tn = n if n <= 8 else 8              # batch rows per block (full or 8)
    grid_i = pl.cdiv(n, tn)

    ch = max(_sublane_pack(pred2.dtype), _sublane_pack(label2.dtype))
    rows = m // _LANES
    use_rows = (m % _LANES == 0) and (rows >= ch)

    if use_rows:
        # Lane/sublane-dense (N, rows, 128) layout; reshape is free.
        pred_in = pred2.reshape(n, rows, _LANES)
        label_in = label2.reshape(n, rows, _LANES)
        budget = _TARGET_BLOCK_BYTES // (tn * _LANES * max_item)
        tr = min(max(ch, _round_down(budget, ch)), _round_down(rows, ch))
        span, chunk, n_chunks = tr, ch, tr // ch
        total_valid, jt = rows, pl.cdiv(rows, tr)
        block_shape = (tn, tr, _LANES)
        acc_shape = (tn, 8, _LANES)
        in_block_bytes = tn * tr * _LANES * (item_p + item_l)
        chunk_f32_bytes = tn * ch * _LANES * 4
    else:
        # Flat (N, M) layout: handles any M with zero padding / extra copies.
        pred_in, label_in = pred2, label2
        if m <= _LANE_CHUNK:
            tm, chunk, n_chunks = m, m, 1
        else:
            tn_pad = _round_up(tn, 8)
            budget = _TARGET_BLOCK_BYTES // (tn_pad * max_item)
            tm = min(max(_LANE_CHUNK, _round_down(budget, _LANE_CHUNK)),
                     _round_down(m, _LANE_CHUNK))
            chunk, n_chunks = _LANE_CHUNK, tm // _LANE_CHUNK
        span = tm
        total_valid, jt = m, pl.cdiv(m, tm)
        block_shape = (tn, tm)
        acc_shape = (tn, chunk)
        in_block_bytes = _round_up(tn, 8) * tm * (item_p + item_l)
        chunk_f32_bytes = tn * chunk * 4

    # Megacore: if the batch axis cannot be split (N <= 8), cut the reduction
    # axis into 2 parallel super-blocks (partial sums are combined in JAX).
    s_split = 2 if (grid_i == 1 and jt >= 2) else 1
    jpb = pl.cdiv(jt, s_split)                       # reduction blocks / split
    can_be_partial = (total_valid % span != 0) or (s_split * jpb != jt)

    if use_rows:
        def in_index(i, s, jj):
            return (i, jnp.minimum(s * jpb + jj, jt - 1), 0)
    else:
        def in_index(i, s, jj):
            return (i, jnp.minimum(s * jpb + jj, jt - 1))

    acc_elems = 1
    for d in acc_shape:
        acc_elems *= d
    vmem_limit = (2 * in_block_bytes            # double-buffered inputs
                  + 3 * acc_elems * 4           # accumulators
                  + 16 * chunk_f32_bytes        # in-flight chunk temporaries
                  + (2 << 20))                  # slack
    vmem_limit = int(min(max(vmem_limit, 8 << 20), 32 << 20))

    kernel = functools.partial(
        _dice_sums_kernel,
        blocks_per_split=jpb, span=span, total_valid=total_valid,
        chunk=chunk, n_chunks=n_chunks, can_be_partial=can_be_partial)

    cost = pl.CostEstimate(
        flops=int(7 * n * m),
        transcendentals=int(n * m),
        bytes_accessed=int(n * m * (item_p + item_l) + s_split * n * 3 * 4))

    return pl.pallas_call(
        kernel,
        out_shape=jax.ShapeDtypeStruct((s_split, n, 3), jnp.float32),
        grid_spec=pltpu.PrefetchScalarGridSpec(
            num_scalar_prefetch=0,
            grid=(grid_i, s_split, jpb),
            in_specs=[pl.BlockSpec(block_shape, in_index),
                      pl.BlockSpec(block_shape, in_index)],
            out_specs=pl.BlockSpec((1, tn, 3), lambda i, s, jj: (s, i, 0)),
            scratch_shapes=[pltpu.VMEM(acc_shape, jnp.float32),
                            pltpu.VMEM(acc_shape, jnp.float32),
                            pltpu.VMEM(acc_shape, jnp.float32)],
        ),
        compiler_params=pltpu.CompilerParams(
            dimension_semantics=("parallel", "parallel", "arbitrary"),
            vmem_limit_bytes=vmem_limit,
        ),
        cost_estimate=cost,
    )(pred_in, label_in)


def dice_loss_per_sample(pred, label, eps=1e-3):
    """Per-sample dice loss; pred/label share shape (N, ...). Returns (N,) f32."""
    sums = jnp.sum(_dice_partial_sums(pred, label), axis=0)   # (N, 3)
    a = sums[:, 0]
    b = sums[:, 1] + eps
    c = sums[:, 2] + eps
    return 1.0 - 2.0 * a / (b + c)


class DiceLoss:
    """JAX/Pallas port of the PyTorch DiceLoss module."""

    def __init__(self, loss_weight=1.0, reduction="mean"):
        self.loss_weight = loss_weight
        self.reduction = reduction

    def __call__(self, cls_score, label, weight=None, avg_factor=None,
                 reduction_override=None):
        assert cls_score.shape == label.shape
        reduction = reduction_override if reduction_override else self.reduction

        loss = dice_loss_per_sample(cls_score, label)  # shape (N,)

        # weighted_loss / weight_reduce_loss semantics (glue, not hot path).
        if weight is not None:
            loss = loss * weight.reshape(loss.shape).astype(loss.dtype)
        if avg_factor is None:
            if reduction == "mean":
                loss = jnp.mean(loss)
            elif reduction == "sum":
                loss = jnp.sum(loss)
            elif reduction == "none":
                pass
            else:
                raise ValueError(reduction)
        else:
            if reduction == "mean":
                loss = jnp.sum(loss) / avg_factor
            elif reduction != "none":
                raise ValueError("avg_factor only valid with mean/none")
        return self.loss_weight * loss


def _reference(cls_score, label, loss_weight=1.0, eps=1e-3):
    n = cls_score.shape[0]
    p = jax.nn.sigmoid(cls_score.reshape(n, -1).astype(jnp.float32))
    l = label.reshape(n, -1).astype(jnp.float32)
    a = jnp.sum(p * l, axis=1)
    b = jnp.sum(p * p, axis=1) + eps
    c = jnp.sum(l * l, axis=1) + eps
    return loss_weight * jnp.mean(1.0 - 2.0 * a / (b + c))


if __name__ == "__main__":
    key = jax.random.PRNGKey(0)
    k1, k2 = jax.random.split(key)

    # NCHW inputs, same shape for pred and label (binary mask-like labels).
    N, C, H, W = 2, 4, 16, 16
    cls_score = jax.random.normal(k1, (N, C, H, W), dtype=jnp.float32)
    label = (jax.random.uniform(k2, (N, C, H, W)) > 0.5).astype(jnp.float32)

    loss_mod = DiceLoss(loss_weight=1.0, reduction="mean")
    out = jax.block_until_ready(loss_mod(cls_score, label))
    ref = _reference(cls_score, label)
    assert jnp.allclose(out, ref, atol=1e-5, rtol=1e-5), (out, ref)

    # Unaligned flattened size (M = 969): exercises the pad-free flat layout,
    # in-kernel tail masking and the parallel reduction-split path.
    N2, C2, H2, W2 = 8, 3, 17, 19
    k3, k4 = jax.random.split(k1)
    p2 = jax.random.normal(k3, (N2, C2, H2, W2), dtype=jnp.float32)
    l2 = (jax.random.uniform(k4, (N2, C2, H2, W2)) > 0.5).astype(jnp.float32)
    out2 = jax.block_until_ready(DiceLoss()(p2, l2))
    ref2 = _reference(p2, l2)
    assert jnp.allclose(out2, ref2, atol=1e-5, rtol=1e-5), (out2, ref2)

    print("KERNEL_OK")
</pallas_src>

<mosaic_0001>
module attributes {stable_mosaic.version = 11 : i64} {
  func.func @_dice_sums_kernel(%arg0: i32, %arg1: i32, %arg2: i32, %arg3: memref<2x8x128xf32, #tpu.memory_space<vmem>>, %arg4: memref<2x8x128xf32, #tpu.memory_space<vmem>>, %arg5: memref<1x2x3xf32, #tpu.memory_space<vmem>>, %arg6: memref<2x8x128xf32, #tpu.memory_space<vmem>>, %arg7: memref<2x8x128xf32, #tpu.memory_space<vmem>>, %arg8: memref<2x8x128xf32, #tpu.memory_space<vmem>>) attributes {dimension_semantics = [#tpu.dimension_semantics<parallel>, #tpu.dimension_semantics<parallel>, #tpu.dimension_semantics<arbitrary>], iteration_bounds = array<i64: 1, 1, 1>, scalar_prefetch = 0 : i64, scratch_operands = 3 : i64, tpu.core_type = #tpu.core_type<tc>, window_params = [{transform_indices = @transform_0, window_bounds = array<i64: 2, 8, 128>}, {transform_indices = @transform_1, window_bounds = array<i64: 2, 8, 128>}, {transform_indices = @transform_2, window_bounds = array<i64: 1, 2, 3>}]} {
    %c0_i32 = arith.constant 0 : i32
    %0 = arith.cmpi eq, %arg2, %c0_i32 : i32
    %1 = arith.extui %0 : i1 to i32
    %c0_i32_0 = arith.constant 0 : i32
    %2 = arith.cmpi ne, %1, %c0_i32_0 : i32
    scf.if %2 {
      %cst_29 = arith.constant 0.000000e+00 : f32
      %31 = vector.broadcast %cst_29 : f32 to vector<2x8x128xf32>
      %c0_30 = arith.constant 0 : index
      %c0_31 = arith.constant 0 : index
      %c0_32 = arith.constant 0 : index
      %32 = vector.load %arg6[%c0_30, %c0_31, %c0_32] : memref<2x8x128xf32, #tpu.memory_space<vmem>>, vector<2x8x128xf32>
      tpu.vector_store %arg6[%c0_30, %c0_31, %c0_32], %31 {strides = array<i32>} : memref<2x8x128xf32, #tpu.memory_space<vmem>>, vector<2x8x128xf32>,
      %cst_33 = arith.constant 0.000000e+00 : f32
      %33 = vector.broadcast %cst_33 : f32 to vector<2x8x128xf32>
      %c0_34 = arith.constant 0 : index
      %c0_35 = arith.constant 0 : index
      %c0_36 = arith.constant 0 : index
      %34 = vector.load %arg7[%c0_34, %c0_35, %c0_36] : memref<2x8x128xf32, #tpu.memory_space<vmem>>, vector<2x8x128xf32>
      tpu.vector_store %arg7[%c0_34, %c0_35, %c0_36], %33 {strides = array<i32>} : memref<2x8x128xf32, #tpu.memory_space<vmem>>, vector<2x8x128xf32>,
      %cst_37 = arith.constant 0.000000e+00 : f32
      %35 = vector.broadcast %cst_37 : f32 to vector<2x8x128xf32>
      %c0_38 = arith.constant 0 : index
      %c0_39 = arith.constant 0 : index
      %c0_40 = arith.constant 0 : index
      %36 = vector.load %arg8[%c0_38, %c0_39, %c0_40] : memref<2x8x128xf32, #tpu.memory_space<vmem>>, vector<2x8x128xf32>
      tpu.vector_store %arg8[%c0_38, %c0_39, %c0_40], %35 {strides = array<i32>} : memref<2x8x128xf32, #tpu.memory_space<vmem>>, vector<2x8x128xf32>,
    } else {
    }
    %cst = arith.constant 0.000000e+00 : f32
    %3 = vector.broadcast %cst : f32 to vector<2x8x128xf32>
    %cst_1 = arith.constant 0.000000e+00 : f32
    %4 = vector.broadcast %cst_1 : f32 to vector<2x8x128xf32>
    %cst_2 = arith.constant 0.000000e+00 : f32
    %5 = vector.broadcast %cst_2 : f32 to vector<2x8x128xf32>
    %c0 = arith.constant 0 : index
    %c0_3 = arith.constant 0 : index
    %c0_4 = arith.constant 0 : index
    %6 = vector.load %arg3[%c0, %c0_3, %c0_4] : memref<2x8x128xf32, #tpu.memory_space<vmem>>, vector<2x8x128xf32>
    %7 = arith.negf %6 : vector<2x8x128xf32>
    %8 = math.exp %7 : vector<2x8x128xf32>
    %cst_5 = arith.constant 1.000000e+00 : f32
    %9 = vector.broadcast %cst_5 : f32 to vector<2x8x128xf32>
    %10 = arith.addf %9, %8 : vector<2x8x128xf32>
    %11 = arith.divf %9, %10 : vector<2x8x128xf32>
    %c0_6 = arith.constant 0 : index
    %c0_7 = arith.constant 0 : index
    %c0_8 = arith.constant 0 : index
    %12 = vector.load %arg4[%c0_6, %c0_7, %c0_8] : memref<2x8x128xf32, #tpu.memory_space<vmem>>, vector<2x8x128xf32>
    %13 = arith.mulf %11, %12 : vector<2x8x128xf32>
    %14 = arith.mulf %11, %11 : vector<2x8x128xf32>
    %15 = arith.mulf %12, %12 : vector<2x8x128xf32>
    %16 = arith.addf %3, %13 : vector<2x8x128xf32>
    %17 = arith.addf %4, %14 : vector<2x8x128xf32>
    %18 = arith.addf %5, %15 : vector<2x8x128xf32>
    %c0_9 = arith.constant 0 : index
    %c0_10 = arith.constant 0 : index
    %c0_11 = arith.constant 0 : index
    %19 = vector.load %arg6[%c0_9, %c0_10, %c0_11] : memref<2x8x128xf32, #tpu.memory_space<vmem>>, vector<2x8x128xf32>
    %20 = arith.addf %19, %16 : vector<2x8x128xf32>
    %c0_12 = arith.constant 0 : index
    %c0_13 = arith.constant 0 : index
    %c0_14 = arith.constant 0 : index
    %21 = vector.load %arg6[%c0_12, %c0_13, %c0_14] : memref<2x8x128xf32, #tpu.memory_space<vmem>>, vector<2x8x128xf32>
    tpu.vector_store %arg6[%c0_12, %c0_13, %c0_14], %20 {strides = array<i32>} : memref<2x8x128xf32, #tpu.memory_space<vmem>>, vector<2x8x128xf32>,
    %c0_15 = arith.constant 0 : index
    %c0_16 = arith.constant 0 : index
    %c0_17 = arith.constant 0 : index
    %22 = vector.load %arg7[%c0_15, %c0_16, %c0_17] : memref<2x8x128xf32, #tpu.memory_space<vmem>>, vector<2x8x128xf32>
    %23 = arith.addf %22, %17 : vector<2x8x128xf32>
    %c0_18 = arith.constant 0 : index
    %c0_19 = arith.constant 0 : index
    %c0_20 = arith.constant 0 : index
    %24 = vector.load %arg7[%c0_18, %c0_19, %c0_20] : memref<2x8x128xf32, #tpu.memory_space<vmem>>, vector<2x8x128xf32>
    tpu.vector_store %arg7[%c0_18, %c0_19, %c0_20], %23 {strides = array<i32>} : memref<2x8x128xf32, #tpu.memory_space<vmem>>, vector<2x8x128xf32>,
    %c0_21 = arith.constant 0 : index
    %c0_22 = arith.constant 0 : index
    %c0_23 = arith.constant 0 : index
    %25 = vector.load %arg8[%c0_21, %c0_22, %c0_23] : memref<2x8x128xf32, #tpu.memory_space<vmem>>, vector<2x8x128xf32>
    %26 = arith.addf %25, %18 : vector<2x8x128xf32>
    %c0_24 = arith.constant 0 : index
    %c0_25 = arith.constant 0 : index
    %c0_26 = arith.constant 0 : index
    %27 = vector.load %arg8[%c0_24, %c0_25, %c0_26] : memref<2x8x128xf32, #tpu.memory_space<vmem>>, vector<2x8x128xf32>
    tpu.vector_store %arg8[%c0_24, %c0_25, %c0_26], %26 {strides = array<i32>} : memref<2x8x128xf32, #tpu.memory_space<vmem>>, vector<2x8x128xf32>,
    %c0_i32_27 = arith.constant 0 : i32
    %28 = arith.cmpi eq, %arg2, %c0_i32_27 : i32
    %29 = arith.extui %28 : i1 to i32
    %c0_i32_28 = arith.constant 0 : i32
    %30 = arith.cmpi ne, %29, %c0_i32_28 : i32
    scf.if %30 {
      %c0_29 = arith.constant 0 : index
      %c0_30 = arith.constant 0 : index
      %c0_31 = arith.constant 0 : index
      %31 = vector.load %arg6[%c0_29, %c0_30, %c0_31] : memref<2x8x128xf32, #tpu.memory_space<vmem>>, vector<2x8x128xf32>
      %cst_32 = arith.constant dense<0.000000e+00> : vector<2x128xf32>
      %32 = vector.multi_reduction <add>, %31, %cst_32 [1] : vector<2x8x128xf32> to vector<2x128xf32>
      %cst_33 = arith.constant dense<0.000000e+00> : vector<2xf32>
      %33 = vector.multi_reduction <add>, %32, %cst_33 [1] : vector<2x128xf32> to vector<2xf32>
      %34 = vector.shape_cast %33 : vector<2xf32> to vector<2x1xf32>
      %c0_34 = arith.constant 0 : index
      %c0_35 = arith.constant 0 : index
      %c0_36 = arith.constant 0 : index
      %35 = vector.load %arg7[%c0_34, %c0_35, %c0_36] : memref<2x8x128xf32, #tpu.memory_space<vmem>>, vector<2x8x128xf32>
      %cst_37 = arith.constant dense<0.000000e+00> : vector<2x128xf32>
      %36 = vector.multi_reduction <add>, %35, %cst_37 [1] : vector<2x8x128xf32> to vector<2x128xf32>
      %cst_38 = arith.constant dense<0.000000e+00> : vector<2xf32>
      %37 = vector.multi_reduction <add>, %36, %cst_38 [1] : vector<2x128xf32> to vector<2xf32>
      %38 = vector.shape_cast %37 : vector<2xf32> to vector<2x1xf32>
      %c0_39 = arith.constant 0 : index
      %c0_40 = arith.constant 0 : index
      %c0_41 = arith.constant 0 : index
      %39 = vector.load %arg8[%c0_39, %c0_40, %c0_41] : memref<2x8x128xf32, #tpu.memory_space<vmem>>, vector<2x8x128xf32>
      %cst_42 = arith.constant dense<0.000000e+00> : vector<2x128xf32>
      %40 = vector.multi_reduction <add>, %39, %cst_42 [1] : vector<2x8x128xf32> to vector<2x128xf32>
      %cst_43 = arith.constant dense<0.000000e+00> : vector<2xf32>
      %41 = vector.multi_reduction <add>, %40, %cst_43 [1] : vector<2x128xf32> to vector<2xf32>
      %42 = vector.shape_cast %41 : vector<2xf32> to vector<2x1xf32>
      %43 = tpu.concatenate %34, %38, %42 in 1 : vector<2x1xf32>, vector<2x1xf32>, vector<2x1xf32> -> vector<2x3xf32>
      %c0_44 = arith.constant 0 : index
      %c0_45 = arith.constant 0 : index
      %c0_46 = arith.constant 0 : index
      %44 = vector.load %arg5[%c0_44, %c0_45, %c0_46] : memref<1x2x3xf32, #tpu.memory_space<vmem>>, vector<1x2x3xf32>
      %45 = vector.shape_cast %44 : vector<1x2x3xf32> to vector<2x3xf32>
      %46 = vector.shape_cast %43 : vector<2x3xf32> to vector<1x2x3xf32>
      tpu.vector_store %arg5[%c0_44, %c0_45, %c0_46], %46 {strides = array<i32>} : memref<1x2x3xf32, #tpu.memory_space<vmem>>, vector<1x2x3xf32>,
    } else {
    }
    return
  }
  func.func @transform_0(%arg0: i32, %arg1: i32, %arg2: i32) -> (i32, i32, i32) {
    %c1_i32 = arith.constant 1 : i32
    %0 = arith.muli %arg1, %c1_i32 : i32
    %1 = arith.addi %0, %arg2 : i32
    %c0_i32 = arith.constant 0 : i32
    %2 = arith.minsi %1, %c0_i32 : i32
    %c0_i32_0 = arith.constant 0 : i32
    %c0_i32_1 = arith.constant 0 : i32
    return %arg0, %2, %c0_i32_0 : i32, i32, i32
  }
  func.func @transform_1(%arg0: i32, %arg1: i32, %arg2: i32) -> (i32, i32, i32) {
    %c1_i32 = arith.constant 1 : i32
    %0 = arith.muli %arg1, %c1_i32 : i32
    %1 = arith.addi %0, %arg2 : i32
    %c0_i32 = arith.constant 0 : i32
    %2 = arith.minsi %1, %c0_i32 : i32
    %c0_i32_0 = arith.constant 0 : i32
    %c0_i32_1 = arith.constant 0 : i32
    return %arg0, %2, %c0_i32_0 : i32, i32, i32
  }
  func.func @transform_2(%arg0: i32, %arg1: i32, %arg2: i32) -> (i32, i32, i32) {
    %c0_i32 = arith.constant 0 : i32
    %c0_i32_0 = arith.constant 0 : i32
    return %arg1, %arg0, %c0_i32 : i32, i32, i32
  }
}

</mosaic_0001>

<llo_original>
// kernel: tpu_custom_call.1
$region0: #{tpu_custom_call.1}
  #allocation0 [shape = 'u32[]', space=smem, size = 0x4, offset = 0x4, fixed_abs, tag = 'smem constant byte address 0x4 - core index']
  #allocation1 [shape = 'u32[144,128]{1,0:T(1,128)}', space=vmem, size = 0x12000, scoped, tag = 'internal scratch']
  #allocation2 [shape = 'f32[2,8,128]{2,1,0:T(8,128)}', space=vmem, size = 0x2000, scoped, tag = 'scratch operand']
  #allocation3 [shape = 'f32[2,8,128]{2,1,0:T(8,128)}', space=vmem, size = 0x2000, scoped, tag = 'scratch operand']
  #allocation4 [shape = 'f32[2,8,128]{2,1,0:T(8,128)}', space=vmem, size = 0x2000, scoped, tag = 'scratch operand']
  %s0 = inlined_call_operand.hbm [shape: f32[2,8,128], index: 0, kind: input, shape index: {}]
  %s1 = inlined_call_operand.hbm [shape: f32[2,8,128], index: 1, kind: input, shape index: {}]
  %s2 = inlined_call_operand.hbm [shape: f32[1,2,3], index: 2, kind: output, shape index: {}]
  %s3 = sld [smem:[#allocation0]]
  $region34: #{tpu_custom_call.1} parent=0
    _
  %s5 = ssub.s32 1, %s3
  %s6 = scalar_select 0, %s5, %s3
  $region1: #{tpu_custom_call.1} parent=0
    #allocation5 [shape = 'u8[8192]{0}', space=vmem, size = 0x2000, scoped, tag = 'input window, operand 0, single buffered']
    #allocation6 [shape = 's32[1]{0}', space=sflag, size = 0x4, scoped, tag = 'scoped memory for tpu_custom_call.1']
    #allocation7 [shape = 's32[1]{0}', space=sflag, size = 0x4, scoped, tag = 'scoped memory for tpu_custom_call.1']
    #allocation8 [shape = 'u8[8192]{0}', space=vmem, size = 0x2000, scoped, tag = 'input window, operand 1, single buffered']
    #allocation9 [shape = 's32[1]{0}', space=sflag, size = 0x4, scoped, tag = 'scoped memory for tpu_custom_call.1']
    #allocation10 [shape = 'u8[1024]{0}', space=vmem, size = 0x400, scoped, tag = 'output window, operand 0, single buffered']
    %7 = vsyncpa [#allocation6], 0
    %8 = vsyncpa [#allocation9], 0
    %9 = vsyncpa [#allocation7], 0
    // Predicated region
    $region2: #{tpu_custom_call.1} parent=1 // pred_check
      _
    $region3: #{tpu_custom_call.1} parent=1 // pred_check_branch
      %11 = sbr.rel (0) target = $region5
    $region4: #{tpu_custom_call.1} parent=1 // pred_region
      %s12 = sadd.s32 0, 0
      %p13 = scmp.lt.s32.totalorder %s12, 0
      %s14 = scalar_select %p13, %s12, 0
      %s16 = ssub.s32 256, 256
      %17 = vsyncadd [#allocation6], %s16
      %s18 = smul.addr %s14, 128
      %s19 = scalar_lea.hbm %s0, %s18
      %s20 = sshll.u32 [#allocation5], 4
      %s21 = int_to_ptr.vmem [resolvable:$true] %s20
      %26 = dma.hbm_to_vmem [thread:$0]  %s19, 256, %s21, [#allocation6], 128, 128, 8
    $region5: #{tpu_custom_call.1} parent=1 // pred_fallthru
      _
    // Predicated region
    $region6: #{tpu_custom_call.1} parent=1 // pred_check
      _
    $region7: #{tpu_custom_call.1} parent=1 // pred_check_branch
      %28 = sbr.rel (0) target = $region9
    $region8: #{tpu_custom_call.1} parent=1 // pred_region
      %s29 = sadd.s32 0, 0
      %p30 = scmp.lt.s32.totalorder %s29, 0
      %s31 = scalar_select %p30, %s29, 0
      %s33 = ssub.s32 256, 256
      %34 = vsyncadd [#allocation9], %s33
      %s35 = smul.addr %s31, 128
      %s36 = scalar_lea.hbm %s1, %s35
      %s37 = sshll.u32 [#allocation8], 4
      %s38 = int_to_ptr.vmem [resolvable:$true] %s37
      %43 = dma.hbm_to_vmem [thread:$0]  %s36, 256, %s38, [#allocation9], 128, 128, 8
    $region9: #{tpu_custom_call.1} parent=1 // pred_fallthru
      _
    // Predicated region
    $region10: #{tpu_custom_call.1} parent=1 // pred_check
      _
    $region11: #{tpu_custom_call.1} parent=1 // pred_check_branch
      %45 = sbr.rel (0) target = $region13
    $region12: #{tpu_custom_call.1} parent=1 // pred_region
      %46 = dma.done [#allocation6], 256
    $region13: #{tpu_custom_call.1} parent=1 // pred_fallthru
      _
    // Predicated region
    $region14: #{tpu_custom_call.1} parent=1 // pred_check
      _
    $region15: #{tpu_custom_call.1} parent=1 // pred_check_branch
      %48 = sbr.rel (0) target = $region17
    $region16: #{tpu_custom_call.1} parent=1 // pred_region
      %49 = dma.done [#allocation9], 256
    $region17: #{tpu_custom_call.1} parent=1 // pred_fallthru
      _
    %s50 = sadd.s32 0, 0
    %p51 = scmp.lt.s32.totalorder %s50, 0
    %s52 = scalar_select %p51, %s50, 0
    %s53 = sadd.s32 0, 0
    %p54 = scmp.lt.s32.totalorder %s53, 0
    %s55 = scalar_select %p54, %s53, 0
    %p56 = scmp.eq.s32.totalorder 0, 0
    // Predicated region
    $region18: #{tpu_custom_call.1} parent=1 // pred_check
      %p57 = pneg %p56
    $region19: #{tpu_custom_call.1} parent=1 // pred_check_branch
      %59 = sbr.rel (%p57) target = $region21
    $region20: #{tpu_custom_call.1} parent=1 // pred_region
      %60 = vst [vmem:[#allocation2] sm:$0xff] 0.0
      %61 = vst [vmem:[#allocation2 + $0x8] sm:$0xff] 0.0
      %62 = vst [vmem:[#allocation3] sm:$0xff] 0.0
      %63 = vst [vmem:[#allocation3 + $0x8] sm:$0xff] 0.0
      %64 = vst [vmem:[#allocation4] sm:$0xff] 0.0
      %65 = vst [vmem:[#allocation4 + $0x8] sm:$0xff] 0.0
    $region21: #{tpu_custom_call.1} parent=1 // pred_fallthru
      _
    %v66 = vld [vmem:[#allocation5] sm:$0xff]
    %v67 = vld [vmem:[#allocation5 + $0x8] sm:$0xff]
    %v68 = vxor.u32 %v66, 2147483648
    %v69 = vxor.u32 %v67, 2147483648
    %v70 = vmul.f32 %v68, 1.442695
    %v71 = vpow.pop %v70
    %v72 = vmul.f32 %v69, 1.442695
    %v73 = vpow.pop %v72
    %v74 = vadd.f32 %v71, 1.0
    %v75 = vadd.f32 %v73, 1.0
    %v76 = vrcp.pop %v74
    %v77 = vmul.f32 1.0, %v76
    %v78 = vrcp.pop %v75
    %v79 = vmul.f32 1.0, %v78
    %v80 = vld [vmem:[#allocation8] sm:$0xff]
    %v81 = vld [vmem:[#allocation8 + $0x8] sm:$0xff]
    %v82 = vmul.f32 %v77, %v80
    %v83 = vmul.f32 %v79, %v81
    %v84 = vmul.f32 %v77, %v77
    %v85 = vmul.f32 %v79, %v79
    %v86 = vmul.f32 %v80, %v80
    %v87 = vmul.f32 %v81, %v81
    %v88 = vadd.f32 %v82, 0.0
    %v89 = vadd.f32 %v83, 0.0
    %v90 = vadd.f32 %v84, 0.0
    %v91 = vadd.f32 %v85, 0.0
    %v92 = vadd.f32 %v86, 0.0
    %v93 = vadd.f32 %v87, 0.0
    %v94 = vld [vmem:[#allocation2] sm:$0xff]
    %v95 = vld [vmem:[#allocation2 + $0x8] sm:$0xff]
    %v96 = vadd.f32 %v94, %v88
    %v97 = vadd.f32 %v95, %v89
    %98 = vst [vmem:[#allocation2] sm:$0xff] %v96
    %99 = vst [vmem:[#allocation2 + $0x8] sm:$0xff] %v97
    %v100 = vld [vmem:[#allocation3] sm:$0xff]
    %v101 = vld [vmem:[#allocation3 + $0x8] sm:$0xff]
    %v102 = vadd.f32 %v100, %v90
    %v103 = vadd.f32 %v101, %v91
    %104 = vst [vmem:[#allocation3] sm:$0xff] %v102
    %105 = vst [vmem:[#allocation3 + $0x8] sm:$0xff] %v103
    %v106 = vld [vmem:[#allocation4] sm:$0xff]
    %v107 = vld [vmem:[#allocation4 + $0x8] sm:$0xff]
    %v108 = vadd.f32 %v106, %v92
    %v109 = vadd.f32 %v107, %v93
    %110 = vst [vmem:[#allocation4] sm:$0xff] %v108
    %111 = vst [vmem:[#allocation4 + $0x8] sm:$0xff] %v109
    // Predicated region
    $region22: #{tpu_custom_call.1} parent=1 // pred_check
      %p112 = pneg %p56
    $region23: #{tpu_custom_call.1} parent=1 // pred_check_branch
      %114 = sbr.rel (%p112) target = $region25
    $region24: #{tpu_custom_call.1} parent=1 // pred_region
      %v115 = vld [vmem:[#allocation2] sm:$0xff]
      %v116 = vld [vmem:[#allocation2 + $0x8] sm:$0xff]
      %v117 = vrot.slane %v115, 4
      %v118 = vadd.f32 %v115, %v117
      %v119 = vrot.slane %v118, 2
      %v120 = vadd.f32 %v118, %v119
      %v121 = vrot.slane %v120, 1
      %v122 = vadd.f32 %v120, %v121
      %v123 = vrot.slane %v116, 4
      %v124 = vadd.f32 %v116, %v123
      %v125 = vrot.slane %v124, 2
      %v126 = vadd.f32 %v124, %v125
      %v127 = vrot.slane %v126, 1
      %v128 = vadd.f32 %v126, %v127
      %vm131 = vcmask 1041409
      %v132 = vsel %vm131, %v128, %v122
      %vm134 = vcmask 1041408
      %v135 = vsel %vm134, %v132, 0.0
      %136 = vadd.xlane.f32.xlu0 %v135
      %v137 = vpop.xlane.xlu0 %136
      %v138 = vld [vmem:[#allocation3] sm:$0xff]
      %v139 = vld [vmem:[#allocation3 + $0x8] sm:$0xff]
      %v140 = vrot.slane %v138, 4
      %v141 = vadd.f32 %v138, %v140
      %v142 = vrot.slane %v141, 2
      %v143 = vadd.f32 %v141, %v142
      %v144 = vrot.slane %v143, 1
      %v145 = vadd.f32 %v143, %v144
      %v146 = vrot.slane %v139, 4
      %v147 = vadd.f32 %v139, %v146
      %v148 = vrot.slane %v147, 2
      %v149 = vadd.f32 %v147, %v148
      %v150 = vrot.slane %v149, 1
      %v151 = vadd.f32 %v149, %v150
      %v154 = vsel %vm131, %v151, %v145
      %v156 = vsel %vm134, %v154, 0.0
      %157 = vadd.xlane.f32.xlu0 %v156
      %v158 = vpop.xlane.xlu0 %157
      %v159 = vld [vmem:[#allocation4] sm:$0xff]
      %v160 = vld [vmem:[#allocation4 + $0x8] sm:$0xff]
      %v161 = vrot.slane %v159, 4
      %v162 = vadd.f32 %v159, %v161
      %v163 = vrot.slane %v162, 2
      %v164 = vadd.f32 %v162, %v163
      %v165 = vrot.slane %v164, 1
      %v166 = vadd.f32 %v164, %v165
      %v167 = vrot.slane %v160, 4
      %v168 = vadd.f32 %v160, %v167
      %v169 = vrot.slane %v168, 2
      %v170 = vadd.f32 %v168, %v169
      %v171 = vrot.slane %v170, 1
      %v172 = vadd.f32 %v170, %v171
      %v175 = vsel %vm131, %v172, %v166
      %v177 = vsel %vm134, %v175, 0.0
      %178 = vadd.xlane.f32.xlu0 %v177
      %v179 = vpop.xlane.xlu0 %178
      %vm180 = vcmask 7168
      %v181 = vsel %vm180, %v137, %v158
      %vm182 = vcmask 15360
      %v183 = vsel %vm182, %v181, %v179
      %vm184 = vcmask 17408
      %185 = vst.msk [vmem:[#allocation10] sm:$0x3] %vm184, %v183
    $region25: #{tpu_custom_call.1} parent=1 // pred_fallthru
      _
    // Predicated region
    $region26: #{tpu_custom_call.1} parent=1 // pred_check
      _
    $region27: #{tpu_custom_call.1} parent=1 // pred_check_branch
      %187 = sbr.rel (0) target = $region29
    $region28: #{tpu_custom_call.1} parent=1 // pred_region
      %s189 = ssub.s32 32, 32
      %190 = vsyncadd [#allocation7], %s189
      %s192 = sshll.u32 [#allocation10], 4
      %s193 = int_to_ptr.vmem [resolvable:$true] %s192
      %195 = dma.vmem_to_hbm [thread:$0]  %s193, 32, %s2, [#allocation7]
    $region29: #{tpu_custom_call.1} parent=1 // pred_fallthru
      _
    // Predicated region
    $region30: #{tpu_custom_call.1} parent=1 // pred_check
      _
    $region31: #{tpu_custom_call.1} parent=1 // pred_check_branch
      %197 = sbr.rel (0) target = $region33
    $region32: #{tpu_custom_call.1} parent=1 // pred_region
      %198 = dma.done [#allocation7], 32
    $region33: #{tpu_custom_call.1} parent=1 // pred_fallthru
      _
    %199 = vsyncpa [#allocation6], 1
    %200 = vsyncpa [#allocation9], 1
    %201 = vsyncpa [#allocation7], 1

</llo_original>
